<compile_context>
chip_gen: v5e
topology: v5e:2x2
jax: 0.10.0
libtpu: 0.0.40
codegen_flags: <defaults>
</compile_context>

<pallas_src>
import functools
import math

import jax
import jax.numpy as jnp
from jax.experimental import pallas as pl
from jax.experimental.pallas import tpu as pltpu


# --------------------------------------------------------------------------- #
# Stage 1: fused QKV projection  out = X @ [Wq | Wk*scale | Wv] + [bq|bk*scale|bv]
# --------------------------------------------------------------------------- #
def qkv_proj_kernel(x_ref, w_ref, b_ref, q_ref, k_ref, v_ref, *, dim_V):
    x = x_ref[0]                                                     # (tn, Din) bf16
    qkv = jnp.dot(x, w_ref[...], preferred_element_type=jnp.float32) + b_ref[...]
    q_ref[0] = qkv[:, :dim_V]                                        # f32 (residual)
    k_ref[0] = qkv[:, dim_V:2 * dim_V].astype(jnp.bfloat16)          # pre-scaled K
    v_ref[0] = qkv[:, 2 * dim_V:].astype(jnp.bfloat16)


def qkv_projection(x_bf, w_qkv, b_qkv, *, dim_V, tn, vmem_limit):
    B, N, dim_in = x_bf.shape
    row_out = lambda: pl.BlockSpec((1, tn, dim_V), lambda b, i: (b, i, 0))
    return pl.pallas_call(
        functools.partial(qkv_proj_kernel, dim_V=dim_V),
        out_shape=(
            jax.ShapeDtypeStruct((B, N, dim_V), jnp.float32),        # Q (unscaled)
            jax.ShapeDtypeStruct((B, N, dim_V), jnp.bfloat16),       # K (scaled)
            jax.ShapeDtypeStruct((B, N, dim_V), jnp.bfloat16),       # V
        ),
        grid_spec=pltpu.PrefetchScalarGridSpec(
            num_scalar_prefetch=0,
            grid=(B, N // tn),
            in_specs=[
                pl.BlockSpec((1, tn, dim_in), lambda b, i: (b, i, 0)),
                pl.BlockSpec((dim_in, 3 * dim_V), lambda b, i: (0, 0)),
                pl.BlockSpec((1, 3 * dim_V), lambda b, i: (0, 0)),
            ],
            out_specs=(row_out(), row_out(), row_out()),
        ),
        compiler_params=pltpu.CompilerParams(
            dimension_semantics=("parallel", "parallel"),
            vmem_limit_bytes=vmem_limit,
        ),
    )(x_bf, w_qkv, b_qkv)


# --------------------------------------------------------------------------- #
# Stage 2: flash attention (online softmax) + Q residual + fc_o + ReLU residual
#   q/k/v are head-major (B, H, N, ds); k is pre-scaled by 1/sqrt(dim_V).
# --------------------------------------------------------------------------- #
def flash_sab_kernel(q_ref, k_ref, v_ref, wo_ref, bo_ref, o_ref,
                     m_scr, l_scr, acc_scr, stage_scr, *, num_heads):
    ki = pl.program_id(2)

    @pl.when(ki == 0)
    def _init():
        m_scr[...] = jnp.full(m_scr.shape, -jnp.inf, jnp.float32)
        l_scr[...] = jnp.zeros(l_scr.shape, jnp.float32)
        acc_scr[...] = jnp.zeros(acc_scr.shape, jnp.float32)

    q = q_ref[0]                                   # (H, tq, ds) f32 (unscaled)
    k = k_ref[0]                                   # (H, tk, ds) bf16 (pre-scaled)
    v = v_ref[0]                                   # (H, tk, ds) bf16
    ds = q.shape[-1]

    # QK^T: contraction on the last dim of both operands (no explicit transpose),
    # head axis batched in one 3-D dot.
    s = jnp.einsum("hqd,hkd->hqk", q.astype(jnp.bfloat16), k,
                   preferred_element_type=jnp.float32)              # (H, tq, tk)

    m_prev = m_scr[...]
    m_new = jnp.maximum(m_prev, jnp.max(s, axis=-1, keepdims=True))
    alpha = jnp.exp(m_prev - m_new)                                  # (H, tq, 1)
    p = jnp.exp(s - m_new)                                           # (H, tq, tk)
    l_scr[...] = alpha * l_scr[...] + jnp.sum(p, axis=-1, keepdims=True)
    acc_scr[...] = alpha * acc_scr[...] + jnp.einsum(
        "hqk,hkd->hqd", p.astype(jnp.bfloat16), v,
        preferred_element_type=jnp.float32)
    m_scr[...] = m_new

    @pl.when(ki == pl.num_programs(2) - 1)
    def _finalize():
        # Exact reciprocal: runs once per query tile, cost is negligible.
        attn = q + acc_scr[...] / l_scr[...]                         # (H, tq, ds) f32
        # Lane-dense assembly: head h goes to lanes [h*ds, (h+1)*ds) of a
        # (tq, dim_V) staging buffer (matches torch.cat(split) semantics),
        # then one fc_o matmul and one lane-dense store.
        for h in range(num_heads):
            stage_scr[:, h * ds:(h + 1) * ds] = attn[h]
        o = stage_scr[...]                                           # (tq, dim_V) f32
        ff = jnp.dot(o.astype(jnp.bfloat16), wo_ref[...],
                     preferred_element_type=jnp.float32) + bo_ref[...]
        o_ref[0] = (o + jnp.maximum(ff, 0.0)).astype(o_ref.dtype)


def flash_attention_sab(q, k, v, wo, bo, *, tq, tk, vmem_limit):
    B, H, N, ds = q.shape
    dim_V = H * ds
    grid = (B, N // tq, N // tk)
    return pl.pallas_call(
        functools.partial(flash_sab_kernel, num_heads=H),
        out_shape=jax.ShapeDtypeStruct((B, N, dim_V), jnp.float32),
        grid_spec=pltpu.PrefetchScalarGridSpec(
            num_scalar_prefetch=0,
            grid=grid,
            in_specs=[
                pl.BlockSpec((1, H, tq, ds), lambda b, qi, ki: (b, 0, qi, 0)),
                pl.BlockSpec((1, H, tk, ds), lambda b, qi, ki: (b, 0, ki, 0)),
                pl.BlockSpec((1, H, tk, ds), lambda b, qi, ki: (b, 0, ki, 0)),
                pl.BlockSpec((dim_V, dim_V), lambda b, qi, ki: (0, 0)),
                pl.BlockSpec((1, dim_V), lambda b, qi, ki: (0, 0)),
            ],
            out_specs=pl.BlockSpec((1, tq, dim_V), lambda b, qi, ki: (b, qi, 0)),
            scratch_shapes=[
                pltpu.VMEM((H, tq, 1), jnp.float32),    # running max m
                pltpu.VMEM((H, tq, 1), jnp.float32),    # running denom l
                pltpu.VMEM((H, tq, ds), jnp.float32),   # running numerator acc
                pltpu.VMEM((tq, dim_V), jnp.float32),   # lane-dense head staging
            ],
        ),
        compiler_params=pltpu.CompilerParams(
            dimension_semantics=("parallel", "parallel", "arbitrary"),
            vmem_limit_bytes=vmem_limit,
        ),
    )(q, k, v, wo, bo)


# --------------------------------------------------------------------------- #
# Wrapper
# --------------------------------------------------------------------------- #
def sab_forward(x, params, *, num_heads, tq=None, tk=None,
                vmem_limit=64 * 1024 * 1024):
    """x: (B, N, dim_in) f32.  params: PyTorch-Linear weights pre-transposed to (in, out)."""
    B, N, dim_in = x.shape
    dim_V = params["wq"].shape[1]
    assert dim_V % num_heads == 0
    ds = dim_V // num_heads

    # 256-wide default tiles (sweep 128 on v5e / up to 512 on v6e).
    if tq is None:
        tq = min(N, 256)
    if tk is None:
        tk = min(N, 256)
    tn = min(N, 256)
    assert N % tq == 0 and N % tk == 0 and N % tn == 0, \
        "seq len must be divisible by the tile sizes"

    scale = 1.0 / math.sqrt(dim_V)
    # Fold 1/sqrt(dim_V) into the K projection weights/bias (static → free).
    w_qkv = jnp.concatenate(
        [params["wq"], params["wk"] * scale, params["wv"]], axis=1).astype(jnp.bfloat16)
    b_qkv = jnp.concatenate(
        [params["bq"], params["bk"] * scale, params["bv"]], axis=1).astype(jnp.float32)
    wo = params["wo"].astype(jnp.bfloat16)
    bo = params["bo"].astype(jnp.float32)

    # Stage 1: project Q/K/V exactly once per token (fused wide MXU pass).
    q, k, v = qkv_projection(x.astype(jnp.bfloat16), w_qkv, b_qkv,
                             dim_V=dim_V, tn=tn, vmem_limit=vmem_limit)

    # Head-major relayout (plain XLA): (B, N, H*ds) -> (B, H, N, ds), so the
    # flash kernel streams per-head tiles with ds on lanes (dense for ds>=128).
    to_heads = lambda t: t.reshape(B, N, num_heads, ds).transpose(0, 2, 1, 3)

    # Stage 2: flash attention + residual + fc_o + ReLU residual.
    return flash_attention_sab(to_heads(q), to_heads(k), to_heads(v), wo, bo,
                               tq=tq, tk=tk, vmem_limit=vmem_limit)


# --------------------------------------------------------------------------- #
# Pure-JAX (f32) replica of the PyTorch MAB forward (ln=False) for validation.
# --------------------------------------------------------------------------- #
def sab_reference(x, params, *, num_heads):
    dim_V = params["wq"].shape[1]
    q = x @ params["wq"] + params["bq"]
    k = x @ params["wk"] + params["bk"]
    v = x @ params["wv"] + params["bv"]
    ds = dim_V // num_heads
    B, N, _ = x.shape
    split = lambda t: jnp.concatenate(
        [t[..., h * ds:(h + 1) * ds] for h in range(num_heads)], 0)
    q_, k_, v_ = split(q), split(k), split(v)
    a = jax.nn.softmax(jnp.einsum("bnd,bmd->bnm", q_, k_) / math.sqrt(dim_V), axis=-1)
    o_ = q_ + jnp.einsum("bnm,bmd->bnd", a, v_)
    o = jnp.concatenate([o_[h * B:(h + 1) * B] for h in range(num_heads)], -1)
    return o + jax.nn.relu(o @ params["wo"] + params["bo"])


def init_params(key, dim_in, dim_out):
    """Deterministic synthetic parameters (PyTorch Linear shapes, pre-transposed to (in, out))."""
    ks = jax.random.split(key, 8)
    mk = lambda k, i, o: jax.random.normal(k, (i, o), jnp.float32) * (1.0 / math.sqrt(i))
    return {
        "wq": mk(ks[0], dim_in, dim_out), "bq": jax.random.normal(ks[1], (1, dim_out)) * 0.02,
        "wk": mk(ks[2], dim_in, dim_out), "bk": jax.random.normal(ks[3], (1, dim_out)) * 0.02,
        "wv": mk(ks[4], dim_in, dim_out), "bv": jax.random.normal(ks[5], (1, dim_out)) * 0.02,
        "wo": mk(ks[6], dim_out, dim_out), "bo": jax.random.normal(ks[7], (1, dim_out)) * 0.02,
    }


if __name__ == "__main__":
    B, N, dim_in, dim_out, num_heads = 2, 16, 32, 32, 4

    key = jax.random.PRNGKey(0)
    kx, kp = jax.random.split(key)
    x = jax.random.normal(kx, (B, N, dim_in), jnp.float32)
    params = init_params(kp, dim_in, dim_out)

    # tq=tk=8 forces multiple query tiles AND multiple online-softmax KV steps
    # even at this tiny test size, exercising the accumulation/init/finalize path.
    out = sab_forward(x, params, num_heads=num_heads, tq=8, tk=8)
    out = jax.block_until_ready(out)

    ref = sab_reference(x, params, num_heads=num_heads)
    assert out.shape == (B, N, dim_out)
    # bf16 MXU inputs => looser element tolerance than the f32 reference,
    # plus a tight mean-error check to catch structural bugs.
    assert jnp.allclose(out, ref, atol=1e-1, rtol=1e-1), "mismatch vs reference (max err)"
    assert float(jnp.mean(jnp.abs(out - ref))) < 2e-2, "mismatch vs reference (mean err)"

    print("KERNEL_OK")
</pallas_src>

<mosaic_0001>
module attributes {stable_mosaic.version = 11 : i64} {
  func.func @qkv_proj_kernel(%arg0: i32, %arg1: i32, %arg2: memref<1x16x32xbf16, #tpu.memory_space<vmem>>, %arg3: memref<32x96xbf16, #tpu.memory_space<vmem>>, %arg4: memref<1x96xf32, #tpu.memory_space<vmem>>, %arg5: memref<1x16x32xf32, #tpu.memory_space<vmem>>, %arg6: memref<1x16x32xbf16, #tpu.memory_space<vmem>>, %arg7: memref<1x16x32xbf16, #tpu.memory_space<vmem>>) attributes {dimension_semantics = [#tpu.dimension_semantics<parallel>, #tpu.dimension_semantics<parallel>], iteration_bounds = array<i64: 2, 1>, scalar_prefetch = 0 : i64, scratch_operands = 0 : i64, tpu.core_type = #tpu.core_type<tc>, window_params = [{transform_indices = @transform_0, window_bounds = array<i64: 1, 16, 32>}, {pipeline_mode = #tpu.pipeline_mode<synchronous>, transform_indices = @transform_1, window_bounds = array<i64: 32, 96>}, {pipeline_mode = #tpu.pipeline_mode<synchronous>, transform_indices = @transform_2, window_bounds = array<i64: 1, 96>}, {transform_indices = @transform_3, window_bounds = array<i64: 1, 16, 32>}, {transform_indices = @transform_4, window_bounds = array<i64: 1, 16, 32>}, {transform_indices = @transform_5, window_bounds = array<i64: 1, 16, 32>}]} {
    %c0 = arith.constant 0 : index
    %c0_0 = arith.constant 0 : index
    %c0_1 = arith.constant 0 : index
    %0 = vector.load %arg2[%c0, %c0_0, %c0_1] : memref<1x16x32xbf16, #tpu.memory_space<vmem>>, vector<1x16x32xbf16>
    %1 = vector.shape_cast %0 : vector<1x16x32xbf16> to vector<16x32xbf16>
    %c0_2 = arith.constant 0 : index
    %c0_3 = arith.constant 0 : index
    %2 = vector.load %arg3[%c0_2, %c0_3] : memref<32x96xbf16, #tpu.memory_space<vmem>>, vector<32x96xbf16>
    %cst = arith.constant dense<0.000000e+00> : vector<16x96xf32>
    %3 = tpu.matmul %1, %2, %cst {dimension_numbers = #tpu.dot_dimension_numbers<[1], [0], [0], [1], [0, 0, 1, 1], [], []>} : vector<16x32xbf16>, vector<32x96xbf16>, vector<16x96xf32> -> vector<16x96xf32>
    %c0_4 = arith.constant 0 : index
    %c0_5 = arith.constant 0 : index
    %4 = vector.load %arg4[%c0_4, %c0_5] : memref<1x96xf32, #tpu.memory_space<vmem>>, vector<1x96xf32>
    %5 = vector.broadcast %4 : vector<1x96xf32> to vector<16x96xf32>
    %6 = arith.addf %3, %5 : vector<16x96xf32>
    %7 = vector.extract_strided_slice %6 {offsets = [0, 0], sizes = [16, 32], strides = [1, 1]} : vector<16x96xf32> to vector<16x32xf32>
    %c0_6 = arith.constant 0 : index
    %c0_7 = arith.constant 0 : index
    %c0_8 = arith.constant 0 : index
    %8 = vector.load %arg5[%c0_6, %c0_7, %c0_8] : memref<1x16x32xf32, #tpu.memory_space<vmem>>, vector<1x16x32xf32>
    %9 = vector.shape_cast %8 : vector<1x16x32xf32> to vector<16x32xf32>
    %10 = vector.shape_cast %7 : vector<16x32xf32> to vector<1x16x32xf32>
    tpu.vector_store %arg5[%c0_6, %c0_7, %c0_8], %10 {strides = array<i32>} : memref<1x16x32xf32, #tpu.memory_space<vmem>>, vector<1x16x32xf32>,
    %11 = vector.extract_strided_slice %6 {offsets = [0, 32], sizes = [16, 32], strides = [1, 1]} : vector<16x96xf32> to vector<16x32xf32>
    %12 = arith.truncf %11 : vector<16x32xf32> to vector<16x32xbf16>
    %c0_9 = arith.constant 0 : index
    %c0_10 = arith.constant 0 : index
    %c0_11 = arith.constant 0 : index
    %13 = vector.load %arg6[%c0_9, %c0_10, %c0_11] : memref<1x16x32xbf16, #tpu.memory_space<vmem>>, vector<1x16x32xbf16>
    %14 = vector.shape_cast %13 : vector<1x16x32xbf16> to vector<16x32xbf16>
    %15 = vector.shape_cast %12 : vector<16x32xbf16> to vector<1x16x32xbf16>
    tpu.vector_store %arg6[%c0_9, %c0_10, %c0_11], %15 {strides = array<i32>} : memref<1x16x32xbf16, #tpu.memory_space<vmem>>, vector<1x16x32xbf16>,
    %16 = vector.extract_strided_slice %6 {offsets = [0, 64], sizes = [16, 32], strides = [1, 1]} : vector<16x96xf32> to vector<16x32xf32>
    %17 = arith.truncf %16 : vector<16x32xf32> to vector<16x32xbf16>
    %c0_12 = arith.constant 0 : index
    %c0_13 = arith.constant 0 : index
    %c0_14 = arith.constant 0 : index
    %18 = vector.load %arg7[%c0_12, %c0_13, %c0_14] : memref<1x16x32xbf16, #tpu.memory_space<vmem>>, vector<1x16x32xbf16>
    %19 = vector.shape_cast %18 : vector<1x16x32xbf16> to vector<16x32xbf16>
    %20 = vector.shape_cast %17 : vector<16x32xbf16> to vector<1x16x32xbf16>
    tpu.vector_store %arg7[%c0_12, %c0_13, %c0_14], %20 {strides = array<i32>} : memref<1x16x32xbf16, #tpu.memory_space<vmem>>, vector<1x16x32xbf16>,
    return
  }
  func.func @transform_0(%arg0: i32, %arg1: i32) -> (i32, i32, i32) {
    %c0_i32 = arith.constant 0 : i32
    %c0_i32_0 = arith.constant 0 : i32
    return %arg0, %arg1, %c0_i32 : i32, i32, i32
  }
  func.func @transform_1(%arg0: i32, %arg1: i32) -> (i32, i32) {
    %c0_i32 = arith.constant 0 : i32
    %c0_i32_0 = arith.constant 0 : i32
    %c0_i32_1 = arith.constant 0 : i32
    return %c0_i32, %c0_i32_0 : i32, i32
  }
  func.func @transform_2(%arg0: i32, %arg1: i32) -> (i32, i32) {
    %c0_i32 = arith.constant 0 : i32
    %c0_i32_0 = arith.constant 0 : i32
    %c0_i32_1 = arith.constant 0 : i32
    return %c0_i32, %c0_i32_0 : i32, i32
  }
  func.func @transform_3(%arg0: i32, %arg1: i32) -> (i32, i32, i32) {
    %c0_i32 = arith.constant 0 : i32
    %c0_i32_0 = arith.constant 0 : i32
    return %arg0, %arg1, %c0_i32 : i32, i32, i32
  }
  func.func @transform_4(%arg0: i32, %arg1: i32) -> (i32, i32, i32) {
    %c0_i32 = arith.constant 0 : i32
    %c0_i32_0 = arith.constant 0 : i32
    return %arg0, %arg1, %c0_i32 : i32, i32, i32
  }
  func.func @transform_5(%arg0: i32, %arg1: i32) -> (i32, i32, i32) {
    %c0_i32 = arith.constant 0 : i32
    %c0_i32_0 = arith.constant 0 : i32
    return %arg0, %arg1, %c0_i32 : i32, i32, i32
  }
}

</mosaic_0001>

<llo_original>
// kernel: tpu_custom_call.1
$region0: #{tpu_custom_call.1}
  #allocation0 [shape = 'u32[]', space=smem, size = 0x4, offset = 0x4, fixed_abs, tag = 'smem constant byte address 0x4 - core index']
  #allocation1 [shape = 'u32[72,128]{1,0:T(1,128)}', space=vmem, size = 0x9000, scoped, tag = 'internal scratch']
  %s0 = inlined_call_operand.hbm [shape: bf16[2,16,32], index: 0, kind: input, shape index: {}]
  %s1 = inlined_call_operand.hbm [shape: bf16[32,96], index: 1, kind: input, shape index: {}]
  %s2 = inlined_call_operand.vmem [shape: f32[1,96], index: 2, kind: input, shape index: {}]
  %s3 = inlined_call_operand.hbm [shape: f32[2,16,32], index: 3, kind: output, shape index: {0}]
  %s4 = inlined_call_operand.hbm [shape: bf16[2,16,32], index: 4, kind: output, shape index: {1}]
  %s5 = inlined_call_operand.hbm [shape: bf16[2,16,32], index: 5, kind: output, shape index: {2}]
  %6 = xla_tuple %s3, %s4, %s5
  %s7 = sld [smem:[#allocation0]]
  $region69: #{tpu_custom_call.1} parent=0
    _
  %s9 = ssub.s32 1, %s7
  %s10 = scalar_select 0, %s9, %s7
  $region1: #{tpu_custom_call.1} parent=0
    #allocation2 [shape = 'u8[8192]{0}', space=vmem, size = 0x2000, scoped, tag = 'input window, operand 0']
    #allocation3 [shape = 's32[2]{0}', space=sflag, size = 0x8, scoped, tag = 'scoped memory for tpu_custom_call.1']
    #allocation4 [shape = 's32[2]{0}', space=sflag, size = 0x8, scoped, tag = 'scoped memory for tpu_custom_call.1']
    #allocation5 [shape = 'u8[8192]{0}', space=vmem, size = 0x2000, scoped, tag = 'input window, operand 1, single buffered']
    #allocation6 [shape = 's32[1]{0}', space=sflag, size = 0x4, scoped, tag = 'scoped memory for tpu_custom_call.1']
    #allocation7 [shape = 'u8[16384]{0}', space=vmem, size = 0x4000, scoped, tag = 'output window, operand 0']
    #allocation8 [shape = 'u8[8192]{0}', space=vmem, size = 0x2000, scoped, tag = 'output window, operand 1']
    #allocation9 [shape = 's32[2]{0}', space=sflag, size = 0x8, scoped, tag = 'scoped memory for tpu_custom_call.1']
    #allocation10 [shape = 'u8[8192]{0}', space=vmem, size = 0x2000, scoped, tag = 'output window, operand 2']
    %11 = vsyncpa [#allocation3], 0
    %s12 = scalar_lea.sflag [#allocation3], 1
    %13 = vsyncpa %s12, 0
    %14 = vsyncpa [#allocation6], 0
    %15 = vsyncpa [#allocation4], 0
    %s16 = scalar_lea.sflag [#allocation4], 1
    %17 = vsyncpa %s16, 0
    %18 = vsyncpa [#allocation9], 0
    %s19 = scalar_lea.sflag [#allocation9], 1
    %20 = vsyncpa %s19, 0
    loop: start=0, step=1, limit=4
    $region2: #{tpu_custom_call.1} parent=1 // loop_pre_header
      _
    $region3: #{tpu_custom_call.1} parent=1 // loop_header
      %s22 = sphi 0, %s26
      %p23 = scmp.ge.s32.totalorder %s22, 4
      %s29 = sphi 0, %s41
      %s30 = sphi 0, %s37
      %s31 = sphi 0, %s29
      %s32 = sphi 0, %s30
      %s33 = sphi 0, %s31
      %s34 = sphi 0, %s32
      %s46 = sphi 0, %s48
      %s49 = sphi 0, %s46
      %s50 = sphi 0, %s49
      %s66 = sphi 0, %s50
      %s70 = sphi 0, %s70
      %s72 = sphi 0, %s70
      %s73 = sphi 0, %s72
      %s87 = sphi 0, %s73
      %s91 = sphi 0, %s91
      %s93 = sphi 0, %s91
      %s94 = sphi 0, %s93
      %s108 = sphi 0, %s94
      %s116 = sphi 0, %s118
      %s119 = sphi 0, %s116
      %s120 = sphi 0, %s119
      %s136 = sphi 0, %s120
      %s144 = sphi 0, %s146
      %s147 = sphi 0, %s144
      %s148 = sphi 0, %s147
      %s164 = sphi 0, %s148
      %s172 = sphi 0, %s174
      %s175 = sphi 0, %s172
      %s176 = sphi 0, %s175
      %s192 = sphi 0, %s176
    $region4: #{tpu_custom_call.1} parent=1 // loop_header_branch
      %25 = sbr.rel (%p23) target = $region8
    $region5: #{tpu_custom_call.1} parent=1 // loop_body
      %s27 = ssub.s32 %s22, 1
      %s28 = ssub.s32 %s22, 2
      %s35 = sadd.s32 1, %s30
      %p36 = scmp.ge.s32.totalorder %s35, 1
      %s37 = scalar_select %p36, 0, %s35
      %s38 = sadd.s32 1, %s29
      %s39 = scalar_select %p36, %s38, %s29
      %p40 = scmp.ge.s32.totalorder %s39, 2
      %s41 = scalar_select %p40, 0, %s39
      %s42 = ssub.s32 %s29, %s41
      %s43 = ssub.s32 %s30, %s37
      %s44 = sor.u32 %s42, %s43
      %p45 = scmp.eq.s32.totalorder %s44, 0
      %s47 = sadd.s32 %s46, 1
      %s48 = scalar_select %p45, %s46, %s47
      %p51 = pneg %p45
      %p52 = scmp.eq.s32.totalorder %s22, 1
      %p53 = por %p51, %p52
      %p54 = scmp.ne.s32.totalorder %s46, %s49
      %p55 = scmp.eq.s32.totalorder %s22, 0
      %p56 = por %p54, %p55
      %p57 = scmp.ne.s32.totalorder %s46, %s49
      %p58 = scmp.eq.s32.totalorder %s27, 1
      %p59 = por %p57, %p58
      %p60 = scmp.ne.s32.totalorder %s49, %s50
      %p61 = scmp.eq.s32.totalorder %s27, 0
      %p62 = por %p60, %p61
      %p63 = scmp.ne.s32.totalorder %s49, %s50
      %p64 = scmp.eq.s32.totalorder %s28, 1
      %p65 = por %p63, %p64
      %p67 = scmp.ne.s32.totalorder %s50, %s66
      %p68 = scmp.eq.s32.totalorder %s28, 0
      %p69 = por %p67, %p68
      %s71 = sadd.s32 %s70, 1
      %p74 = scmp.eq.s32.totalorder %s22, 1
      %p75 = scmp.ne.s32.totalorder %s70, %s72
      %p76 = scmp.eq.s32.totalorder %s22, 0
      %p77 = por %p75, %p76
      %p78 = scmp.ne.s32.totalorder %s70, %s72
      %p79 = scmp.eq.s32.totalorder %s27, 1
      %p80 = por %p78, %p79
      %p81 = scmp.ne.s32.totalorder %s72, %s73
      %p82 = scmp.eq.s32.totalorder %s27, 0
      %p83 = por %p81, %p82
      %p84 = scmp.ne.s32.totalorder %s72, %s73
      %p85 = scmp.eq.s32.totalorder %s28, 1
      %p86 = por %p84, %p85
      %p88 = scmp.ne.s32.totalorder %s73, %s87
      %p89 = scmp.eq.s32.totalorder %s28, 0
      %p90 = por %p88, %p89
      %s92 = sadd.s32 %s91, 1
      %p95 = scmp.eq.s32.totalorder %s22, 1
      %p96 = scmp.ne.s32.totalorder %s91, %s93
      %p97 = scmp.eq.s32.totalorder %s22, 0
      %p98 = por %p96, %p97
      %p99 = scmp.ne.s32.totalorder %s91, %s93
      %p100 = scmp.eq.s32.totalorder %s27, 1
      %p101 = por %p99, %p100
      %p102 = scmp.ne.s32.totalorder %s93, %s94
      %p103 = scmp.eq.s32.totalorder %s27, 0
      %p104 = por %p102, %p103
      %p105 = scmp.ne.s32.totalorder %s93, %s94
      %p106 = scmp.eq.s32.totalorder %s28, 1
      %p107 = por %p105, %p106
      %p109 = scmp.ne.s32.totalorder %s94, %s108
      %p110 = scmp.eq.s32.totalorder %s28, 0
      %p111 = por %p109, %p110
      %s112 = ssub.s32 %s29, %s41
      %s113 = ssub.s32 %s30, %s37
      %s114 = sor.u32 %s112, %s113
      %p115 = scmp.eq.s32.totalorder %s114, 0
      %s117 = sadd.s32 %s116, 1
      %s118 = scalar_select %p115, %s116, %s117
      %p121 = pneg %p115
      %p122 = scmp.eq.s32.totalorder %s22, 1
      %p123 = por %p121, %p122
      %p124 = scmp.ne.s32.totalorder %s116, %s119
      %p125 = scmp.eq.s32.totalorder %s22, 0
      %p126 = por %p124, %p125
      %p127 = scmp.ne.s32.totalorder %s116, %s119
      %p128 = scmp.eq.s32.totalorder %s27, 1
      %p129 = por %p127, %p128
      %p130 = scmp.ne.s32.totalorder %s119, %s120
      %p131 = scmp.eq.s32.totalorder %s27, 0
      %p132 = por %p130, %p131
      %p133 = scmp.ne.s32.totalorder %s119, %s120
      %p134 = scmp.eq.s32.totalorder %s28, 1
      %p135 = por %p133, %p134
      %p137 = scmp.ne.s32.totalorder %s120, %s136
      %p138 = scmp.eq.s32.totalorder %s28, 0
      %p139 = por %p137, %p138
      %s140 = ssub.s32 %s29, %s41
      %s141 = ssub.s32 %s30, %s37
      %s142 = sor.u32 %s140, %s141
      %p143 = scmp.eq.s32.totalorder %s142, 0
      %s145 = sadd.s32 %s144, 1
      %s146 = scalar_select %p143, %s144, %s145
      %p149 = pneg %p143
      %p150 = scmp.eq.s32.totalorder %s22, 1
      %p151 = por %p149, %p150
      %p152 = scmp.ne.s32.totalorder %s144, %s147
      %p153 = scmp.eq.s32.totalorder %s22, 0
      %p154 = por %p152, %p153
      %p155 = scmp.ne.s32.totalorder %s144, %s147
      %p156 = scmp.eq.s32.totalorder %s27, 1
      %p157 = por %p155, %p156
      %p158 = scmp.ne.s32.totalorder %s147, %s148
      %p159 = scmp.eq.s32.totalorder %s27, 0
      %p160 = por %p158, %p159
      %p161 = scmp.ne.s32.totalorder %s147, %s148
      %p162 = scmp.eq.s32.totalorder %s28, 1
      %p163 = por %p161, %p162
      %p165 = scmp.ne.s32.totalorder %s148, %s164
      %p166 = scmp.eq.s32.totalorder %s28, 0
      %p167 = por %p165, %p166
      %s168 = ssub.s32 %s29, %s41
      %s169 = ssub.s32 %s30, %s37
      %s170 = sor.u32 %s168, %s169
      %p171 = scmp.eq.s32.totalorder %s170, 0
      %s173 = sadd.s32 %s172, 1
      %s174 = scalar_select %p171, %s172, %s173
      %p177 = pneg %p171
      %p178 = scmp.eq.s32.totalorder %s22, 1
      %p179 = por %p177, %p178
      %p180 = scmp.ne.s32.totalorder %s172, %s175
      %p181 = scmp.eq.s32.totalorder %s22, 0
      %p182 = por %p180, %p181
      %p183 = scmp.ne.s32.totalorder %s172, %s175
      %p184 = scmp.eq.s32.totalorder %s27, 1
      %p185 = por %p183, %p184
      %p186 = scmp.ne.s32.totalorder %s175, %s176
      %p187 = scmp.eq.s32.totalorder %s27, 0
      %p188 = por %p186, %p187
      %p189 = scmp.ne.s32.totalorder %s175, %s176
      %p190 = scmp.eq.s32.totalorder %s28, 1
      %p191 = por %p189, %p190
      %p193 = scmp.ne.s32.totalorder %s176, %s192
      %p194 = scmp.eq.s32.totalorder %s28, 0
      %p195 = por %p193, %p194
      %p196 = scmp.le.s32.totalorder 1, %s22
      %p197 = scmp.lt.s32.totalorder %s22, 3
      %p198 = pnand %p196, %p197
      %p199 = pneg %p198
      // Predicated region
      $region9: #{tpu_custom_call.1} parent=5 // pred_check
        _
      $region10: #{tpu_custom_call.1} parent=5 // pred_check_branch
        %201 = sbr.rel (%p198) target = $region12
      $region11: #{tpu_custom_call.1} parent=5 // pred_region
        %s202 = ssub.s32 %s22, 1
        // Predicated region
        $region13: #{tpu_custom_call.1} parent=11 // pred_check
          %p203 = pneg %p83
        $region14: #{tpu_custom_call.1} parent=11 // pred_check_branch
          %205 = sbr.rel (%p203) target = $region16
        $region15: #{tpu_custom_call.1} parent=11 // pred_region
          %207 = vsyncadd [#allocation6], 0
          %s208 = sshll.u32 %s1, 4
          %s209 = int_to_ptr.hbm [resolvable:$true] %s208
          %s210 = sshll.u32 [#allocation5], 4
          %s211 = int_to_ptr.vmem [resolvable:$true] %s210
          %216 = dma.hbm_to_vmem [thread:$0]  %s209, 256, %s211, [#allocation6], 64, 64, 4
        $region16: #{tpu_custom_call.1} parent=11 // pred_fallthru
          _
        // Predicated region
        $region17: #{tpu_custom_call.1} parent=11 // pred_check
          %p217 = pneg %p104
        $region18: #{tpu_custom_call.1} parent=11 // pred_check_branch
          %219 = sbr.rel (%p217) target = $region20
        $region19: #{tpu_custom_call.1} parent=11 // pred_region
          _
        $region20: #{tpu_custom_call.1} parent=11 // pred_fallthru
          _
      $region12: #{tpu_custom_call.1} parent=5 // pred_fallthru
        _
      %p220 = scmp.lt.s32.totalorder %s22, 2
      // Predicated region
      $region21: #{tpu_custom_call.1} parent=5 // pred_check
        %p221 = pneg %p220
      $region22: #{tpu_custom_call.1} parent=5 // pred_check_branch
        %223 = sbr.rel (%p221) target = $region24
      $region23: #{tpu_custom_call.1} parent=5 // pred_region
        // Predicated region
        $region25: #{tpu_custom_call.1} parent=23 // pred_check
          %p224 = pneg %p56
        $region26: #{tpu_custom_call.1} parent=23 // pred_check_branch
          %226 = sbr.rel (%p224) target = $region28
        $region27: #{tpu_custom_call.1} parent=23 // pred_region
          %s227 = sand.u32 %s46, 1
          %s228 = scalar_lea.sflag [#allocation3], %s227
          %s229 = sand.u32 %s46, 1
          %s230 = smul.addr %s229, 8
          %s231 = scalar_lea.vmem [#allocation2], %s230
          %s232 = smul.u32 2, %s30
          %234 = vsyncadd %s228, 0
          %s235 = smul.addr %s29, 2
          %s236 = sadd.s32 %s232, %s235
          %s237 = smul.addr %s236, 4
          %s238 = scalar_lea.hbm %s0, %s237
          %s239 = sshll.u32 %s238, 4
          %s240 = int_to_ptr.hbm [resolvable:$true] %s239
          %s241 = sshll.u32 %s231, 4
          %s242 = int_to_ptr.vmem [resolvable:$true] %s241
          %247 = dma.hbm_to_vmem [thread:$0]  %s240, 128, %s242, %s228, 64, 64, 4
        $region28: #{tpu_custom_call.1} parent=23 // pred_fallthru
          _
      $region24: #{tpu_custom_call.1} parent=5 // pred_fallthru
        _
      %p248 = scmp.le.s32.totalorder 1, %s22
      %p249 = scmp.lt.s32.totalorder %s22, 3
      %p250 = pnand %p248, %p249
      %p251 = pneg %p250
      // Predicated region
      $region29: #{tpu_custom_call.1} parent=5 // pred_check
        _
      $region30: #{tpu_custom_call.1} parent=5 // pred_check_branch
        %253 = sbr.rel (%p250) target = $region32
      $region31: #{tpu_custom_call.1} parent=5 // pred_region
        %s254 = ssub.s32 %s22, 1
        %s255 = sand.u32 %s49, 1
        %s256 = scalar_lea.sflag [#allocation3], %s255
        %s257 = sand.u32 %s49, 1
        %s258 = smul.addr %s257, 8
        %s259 = scalar_lea.vmem [#allocation2], %s258
        // Predicated region
        $region33: #{tpu_custom_call.1} parent=31 // pred_check
          %p260 = pneg %p62
        $region34: #{tpu_custom_call.1} parent=31 // pred_check_branch
          %262 = sbr.rel (%p260) target = $region36
        $region35: #{tpu_custom_call.1} parent=31 // pred_region
          %264 = dma.done %s256, 128
        $region36: #{tpu_custom_call.1} parent=31 // pred_fallthru
          _
        // Predicated region
        $region37: #{tpu_custom_call.1} parent=31 // pred_check
          %p265 = pneg %p83
        $region38: #{tpu_custom_call.1} parent=31 // pred_check_branch
          %267 = sbr.rel (%p265) target = $region40
        $region39: #{tpu_custom_call.1} parent=31 // pred_region
          %269 = dma.done [#allocation6], 256
        $region40: #{tpu_custom_call.1} parent=31 // pred_fallthru
          _
        %s270 = sand.u32 %s49, 1
        %s271 = scalar_lea.sflag [#allocation3], %s270
        %s272 = sand.u32 %s49, 1
        %s273 = smul.addr %s272, 8
        %s274 = scalar_lea.vmem [#allocation2], %s273
        %p275 = pneg %p62
        %p276 = pneg %p59
        %p277 = pneg %p83
        %p278 = pneg %p80
        %p279 = pneg %p104
        %p280 = pneg %p101
        %p281 = pneg %p132
        %p282 = pneg %p129
        %s283 = sand.u32 %s119, 1
        %s284 = scalar_lea.sflag [#allocation4], %s283
        %s285 = sand.u32 %s119, 1
        %s286 = smul.addr %s285, 16
        %s287 = scalar_lea.vmem [#allocation7], %s286
        %p288 = pneg %p160
        %p289 = pneg %p157
        %s290 = sand.u32 %s27, 1
        %s291 = scalar_lea.sflag [#allocation9], %s290
        %s292 = sand.u32 %s147, 1
        %s293 = smul.addr %s292, 8
        %s294 = scalar_lea.vmem [#allocation8], %s293
        %p295 = pneg %p188
        %p296 = pneg %p185
        %s297 = sand.u32 %s27, 1
        %s298 = scalar_lea.sflag [#allocation9], %s297
        %s299 = sand.u32 %s175, 1
        %s300 = smul.addr %s299, 8
        %s301 = scalar_lea.vmem [#allocation10], %s300
        %s302 = smul.u32 2, %s32
        %s303 = smul.u32 2, %s32
        %s304 = smul.u32 2, %s32
        %s305 = smul.u32 2, %s32
        %v307 = vld [vmem:[%s259] sm:$0xf]
        %v308 = vld [vmem:[%s259 + $0x4] sm:$0xf]
        %v309 = vld [vmem:[#allocation5] sm:$0xf]
        %v310 = vld [vmem:[#allocation5 + $0x4] sm:$0xf]
        %v311 = vld [vmem:[#allocation5 + $0x8] sm:$0xf]
        %v312 = vld [vmem:[#allocation5 + $0xc] sm:$0xf]
        %v313 = vld [vmem:[%s2] sm:$0x1]
        %v315 = vperm.slane %v313, 0
        %v319 = vunpack.c.l.b16 %v307
        %v320 = vunpack.c.l.b16 %v308
        %v321 = vpack.c.b16 %v320, %v319
        %v326 = vunpack.c.l.b16 %v309
        %v327 = vunpack.c.l.b16 %v310
        %v328 = vunpack.c.l.b16 %v311
        %v329 = vunpack.c.l.b16 %v312
        %v330 = vpack.c.b16 %v327, %v326
        %v331 = vpack.c.b16 %v329, %v328
        %vm334 = vcmask 261120
        %v336 = vsel %vm334, %v321, 0
        %338 = vmatpush.bf16.msra.mxu0 0
        %339 = vmatpush.bf16.msra.mxu0 0
        %340 = vmatpush.bf16.msra.mxu0 0
        %341 = vmatpush.bf16.msra.mxu0 0
        %342 = vmatpush.bf16.msra.mxu0 0
        %343 = vmatpush.bf16.msra.mxu0 0
        %344 = vmatpush.bf16.msra.mxu0 %v331
        %345 = vmatpush.bf16.msra.mxu0 %v330
        %346 = vmatmul.bf16.gmra.mxu0 %v336
        %v347 = vpop.f32.mrf.mxu0
        %v348 = vadd.f32 %v315, %v347
        %v349 = vpop.f32.mrf.mxu0
        %v350 = vadd.f32 %v315, %v349
        %351 = vdwg.mxu0
        %352 = vst.msk [vmem:[%s287] sm:$0xff] %vm334, %v348
        %353 = vst.msk [vmem:[%s287 + $0x8] sm:$0xff] %vm334, %v350
        %v354 = vpack.c.bf16 %v348, %v348
        %v355 = vpack.c.bf16 %v350, %v350
        %358 = vrot.lane.b32.xlu0 %v354, 96
        %v359 = vpop.permute.xlu0 %358
        %360 = vrot.lane.b32.xlu0 %v355, 96
        %v361 = vpop.permute.xlu0 %360
        %vm364 = vcmask 257024
        %365 = vst.msk [vmem:[%s294] sm:$0xf] %vm364, %v359
        %366 = vst.msk [vmem:[%s294 + $0x4] sm:$0xf] %vm364, %v361
        %367 = vrot.lane.b32.xlu0 %v354, 64
        %v368 = vpop.permute.xlu0 %367
        %369 = vrot.lane.b32.xlu0 %v355, 64
        %v370 = vpop.permute.xlu0 %369
        %373 = vst.msk [vmem:[%s301] sm:$0xf] %vm364, %v368
        %374 = vst.msk [vmem:[%s301 + $0x4] sm:$0xf] %vm364, %v370
        %s375 = sand.u32 %s119, 1
        %s376 = scalar_lea.sflag [#allocation4], %s375
        %s377 = sand.u32 %s119, 1
        %s378 = smul.addr %s377, 16
        %s379 = scalar_lea.vmem [#allocation7], %s378
        %s380 = sand.u32 %s27, 1
        %s381 = scalar_lea.sflag [#allocation9], %s380
        %s382 = sand.u32 %s147, 1
        %s383 = smul.addr %s382, 8
        %s384 = scalar_lea.vmem [#allocation8], %s383
        %s385 = sand.u32 %s27, 1
        %s386 = scalar_lea.sflag [#allocation9], %s385
        %s387 = sand.u32 %s175, 1
        %s388 = smul.addr %s387, 8
        %s389 = scalar_lea.vmem [#allocation10], %s388
        // Predicated region
        $region41: #{tpu_custom_call.1} parent=31 // pred_check
          %p390 = pneg %p129
        $region42: #{tpu_custom_call.1} parent=31 // pred_check_branch
          %392 = sbr.rel (%p390) target = $region44
        $region43: #{tpu_custom_call.1} parent=31 // pred_region
          %s393 = smul.u32 2, %s32
          %395 = vsyncadd %s376, 0
          %s396 = smul.addr %s31, 2
          %s397 = sadd.s32 %s393, %s396
          %s398 = smul.addr %s397, 8
          %s399 = scalar_lea.hbm %s3, %s398
          %s400 = sshll.u32 %s379, 4
          %s401 = int_to_ptr.vmem [resolvable:$true] %s400
          %s402 = sshll.u32 %s399, 4
          %s403 = int_to_ptr.hbm [resolvable:$true] %s402
          %408 = dma.vmem_to_hbm [thread:$0]  %s401, 256, %s403, %s376, 128, 128, 8
        $region44: #{tpu_custom_call.1} parent=31 // pred_fallthru
          _
        // Predicated region
        $region45: #{tpu_custom_call.1} parent=31 // pred_check
          %p409 = pneg %p157
        $region46: #{tpu_custom_call.1} parent=31 // pred_check_branch
          %411 = sbr.rel (%p409) target = $region48
        $region47: #{tpu_custom_call.1} parent=31 // pred_region
          %s412 = smul.u32 2, %s32
          %414 = vsyncadd %s381, 0
          %s415 = smul.addr %s31, 2
          %s416 = sadd.s32 %s412, %s415
          %s417 = smul.addr %s416, 4
          %s418 = scalar_lea.hbm %s4, %s417
          %s419 = sshll.u32 %s384, 4
          %s420 = int_to_ptr.vmem [resolvable:$true] %s419
          %s421 = sshll.u32 %s418, 4
          %s422 = int_to_ptr.hbm [resolvable:$true] %s421
          %427 = dma.vmem_to_hbm [thread:$0]  %s420, 128, %s422, %s381, 64, 64, 4
        $region48: #{tpu_custom_call.1} parent=31 // pred_fallthru
          _
        // Predicated region
        $region49: #{tpu_custom_call.1} parent=31 // pred_check
          %p428 = pneg %p185
        $region50: #{tpu_custom_call.1} parent=31 // pred_check_branch
          %430 = sbr.rel (%p428) target = $region52
        $region51: #{tpu_custom_call.1} parent=31 // pred_region
          %s431 = smul.u32 2, %s32
          %433 = vsyncadd %s386, 0
          %s434 = smul.addr %s31, 2
          %s435 = sadd.s32 %s431, %s434
          %s436 = smul.addr %s435, 4
          %s437 = scalar_lea.hbm %s5, %s436
          %s438 = sshll.u32 %s389, 4
          %s439 = int_to_ptr.vmem [resolvable:$true] %s438
          %s440 = sshll.u32 %s437, 4
          %s441 = int_to_ptr.hbm [resolvable:$true] %s440
          %446 = dma.vmem_to_hbm [thread:$0]  %s439, 128, %s441, %s386, 64, 64, 4
        $region52: #{tpu_custom_call.1} parent=31 // pred_fallthru
          _
      $region32: #{tpu_custom_call.1} parent=5 // pred_fallthru
        _
      %p447 = scmp.le.s32.totalorder 2, %s22
      // Predicated region
      $region53: #{tpu_custom_call.1} parent=5 // pred_check
        %p448 = pneg %p447
      $region54: #{tpu_custom_call.1} parent=5 // pred_check_branch
        %450 = sbr.rel (%p448) target = $region56
      $region55: #{tpu_custom_call.1} parent=5 // pred_region
        %s451 = ssub.s32 %s22, 2
        // Predicated region
        $region57: #{tpu_custom_call.1} parent=55 // pred_check
          %p452 = pneg %p135
        $region58: #{tpu_custom_call.1} parent=55 // pred_check_branch
          %454 = sbr.rel (%p452) target = $region60
        $region59: #{tpu_custom_call.1} parent=55 // pred_region
          %s455 = sand.u32 %s120, 1
          %s456 = scalar_lea.sflag [#allocation4], %s455
          %s457 = sand.u32 %s120, 1
          %s458 = smul.addr %s457, 16
          %s459 = scalar_lea.vmem [#allocation7], %s458
          %461 = dma.done %s456, 256
        $region60: #{tpu_custom_call.1} parent=55 // pred_fallthru
          _
        // Predicated region
        $region61: #{tpu_custom_call.1} parent=55 // pred_check
          %p462 = pneg %p163
        $region62: #{tpu_custom_call.1} parent=55 // pred_check_branch
          %464 = sbr.rel (%p462) target = $region64
        $region63: #{tpu_custom_call.1} parent=55 // pred_region
          %s465 = sand.u32 %s28, 1
          %s466 = scalar_lea.sflag [#allocation9], %s465
          %s467 = sand.u32 %s148, 1
          %s468 = smul.addr %s467, 8
          %s469 = scalar_lea.vmem [#allocation8], %s468
          %471 = dma.done %s466, 128
        $region64: #{tpu_custom_call.1} parent=55 // pred_fallthru
          _
        // Predicated region
        $region65: #{tpu_custom_call.1} parent=55 // pred_check
          %p472 = pneg %p191
        $region66: #{tpu_custom_call.1} parent=55 // pred_check_branch
          %474 = sbr.rel (%p472) target = $region68
        $region67: #{tpu_custom_call.1} parent=55 // pred_region
          %s475 = sand.u32 %s28, 1
          %s476 = scalar_lea.sflag [#allocation9], %s475
          %s477 = sand.u32 %s176, 1
          %s478 = smul.addr %s477, 8
          %s479 = scalar_lea.vmem [#allocation10], %s478
          %481 = dma.done %s476, 128
        $region68: #{tpu_custom_call.1} parent=55 // pred_fallthru
          _
      $region56: #{tpu_custom_call.1} parent=5 // pred_fallthru
        _
    $region6: #{tpu_custom_call.1} parent=1 // loop_footer
      %s26 = sadd.s32 1, %s22
    $region7: #{tpu_custom_call.1} parent=1 // loop_footer_branch
      %21 = sbr.rel target = $region3
    $region8: #{tpu_custom_call.1} parent=1 // loop_exit
      _
    %482 = vsyncpa [#allocation3], 1
    %s483 = scalar_lea.sflag [#allocation3], 1
    %484 = vsyncpa %s483, 1
    %485 = vsyncpa [#allocation6], 1
    %486 = vsyncpa [#allocation4], 1
    %s487 = scalar_lea.sflag [#allocation4], 1
    %488 = vsyncpa %s487, 1
    %489 = vsyncpa [#allocation9], 1
    %s490 = scalar_lea.sflag [#allocation9], 1
    %491 = vsyncpa %s490, 1

</llo_original>
